<compile_context>
chip_gen: v5e
topology: v5e:2x2
jax: 0.10.0
libtpu: 0.0.40
codegen_flags: <defaults>
</compile_context>

<pallas_src>
import functools

import jax
import jax.numpy as jnp
from jax.experimental import pallas as pl
from jax.experimental.pallas import tpu as pltpu


def _rmsnorm_kernel(x_ref, w_ref, out_ref, *, eps):
    # residual=None path: only the normed output is produced by the kernel;
    # the residual return value is just the (unchanged) input, handled in the wrapper.
    x = x_ref[...].astype(jnp.float32)
    var = jnp.mean(x * x, axis=-1, keepdims=True)
    # Single f32 multiply chain (w_ref is f32), one downcast at the store.
    out_ref[...] = (x * jax.lax.rsqrt(var + eps) * w_ref[...]).astype(out_ref.dtype)


def _rmsnorm_residual_kernel(x_ref, r_ref, w_ref, out_ref, res_ref, *, eps):
    # residual path: hidden_states += residual (in input dtype), res = that sum
    x_sum = x_ref[...] + r_ref[...]
    res_ref[...] = x_sum.astype(res_ref.dtype)
    x = x_sum.astype(jnp.float32)
    var = jnp.mean(x * x, axis=-1, keepdims=True)
    out_ref[...] = (x * jax.lax.rsqrt(var + eps) * w_ref[...]).astype(out_ref.dtype)


def _vmem_budget_and_limit():
    """(working-set budget, vmem_limit_bytes) picked per TPU generation."""
    vmem_bytes = None
    try:
        info = pltpu.get_tpu_info()
        vmem_bytes = getattr(info, "vmem_capacity_bytes", None)
    except Exception:
        vmem_bytes = None
    if vmem_bytes is not None and vmem_bytes >= (100 << 20):
        # v5e / v6e: 128 MiB physical VMEM per TensorCore — go big. v5e's
        # default scoped limit is only 16 MiB, so the explicit raise is mandatory.
        return 64 << 20, 100 << 20
    # v7x (64 MiB per TensorCore) or unknown chip: stay conservative so the
    # double-buffered inputs/outputs keep pipeline headroom.
    return 30 << 20, 48 << 20


def _choose_block_rows(tokens, per_row_bytes, budget):
    """8-aligned row-block size.

    Sized from the per-generation VMEM budget, then shrunk (never below ~128
    rows) so the grid has several steps — >=2 per TensorCore on v7x and >=4 on
    the single-TC parts — letting prefetch/writeback DMAs overlap compute.
    Does NOT need to divide `tokens`; the grid uses cdiv and Pallas masks the
    partial last block (per-row mean is unaffected, padded rows are discarded
    on store).
    """
    if tokens <= 8:
        return tokens
    cap = max(8, min(1024, budget // max(per_row_bytes, 1)))
    cap -= cap % 8
    cap = max(cap, 8)

    # Desired step count if VMEM alone wouldn't force a split; keep blocks
    # >=128 rows (below that the ~0.35 us/step overhead starts to dominate).
    desired_steps = min(8, max(1, tokens // 128))
    per_step = -(-tokens // desired_steps)          # ceil
    per_step = ((per_step + 7) // 8) * 8            # round UP to sublane multiple

    block = min(cap, per_step)
    if block >= tokens:
        return tokens  # single full-extent block (any row count is legal)
    return block


def qwen2_rmsnorm(hidden_states, weight, residual=None, eps=1e-6, *, block_rows=None):
    """Returns (normed_hidden_states, residual_out), matching Qwen2RMSNorm.forward.

    Notes:
      * Real Qwen2 hidden sizes (1536/3584/...) are multiples of 128, keeping
        stores lane-dense; smaller hidden sizes still work (full-dim block).
      * residual path: the residual output aliases the hidden_states buffer
        (input_output_aliases={0: 1}); callers should donate hidden_states
        (jax.jit donate_argnums) to realize the saving, otherwise XLA copies
        defensively (correct either way).
    """
    tokens, hidden = hidden_states.shape
    in_dtype = hidden_states.dtype
    # torch semantics (explicit branch of the module): normed activations are cast
    # to the weight dtype when the weight is 16-bit, otherwise stay float32.
    if weight.dtype in (jnp.float16, jnp.bfloat16):
        out_dtype = weight.dtype
    else:
        out_dtype = jnp.float32

    budget, vmem_limit = _vmem_budget_and_limit()

    bytes_in = jnp.dtype(in_dtype).itemsize
    bytes_out = jnp.dtype(out_dtype).itemsize
    n_in = 2 if residual is not None else 1
    n_out = 2 if residual is not None else 1
    # double-buffered inputs + outputs, plus ~one live (R,H) f32 intermediate
    per_row = hidden * (2 * n_in * bytes_in + 2 * n_out * bytes_out + 4)
    if block_rows is None:
        block_rows = _choose_block_rows(tokens, per_row, budget)
    grid = (pl.cdiv(tokens, block_rows),)

    # Pre-cast the weight once in the wrapper (f32 so the in-kernel multiply is
    # a plain f32 VPU op even on v5e); broadcasts (1,H)->(R,H) in the kernel.
    w2d = weight.astype(jnp.float32).reshape(1, hidden)

    row_spec = pl.BlockSpec((block_rows, hidden), lambda i: (i, 0))
    w_spec = pl.BlockSpec((1, hidden), lambda i: (0, 0))

    cparams = pltpu.CompilerParams(
        dimension_semantics=("parallel",),
        vmem_limit_bytes=vmem_limit,
    )
    # TODO(synk): if profiles on v5e/v6e show exposed DMA at low step counts,
    # try pipeline_mode=pl.Buffered(3) on the row specs (skip on v7x).

    if residual is None:
        # Kernel writes only the normed output; the residual return is just the
        # unchanged input, so no second HBM stream is needed.
        normed = pl.pallas_call(
            functools.partial(_rmsnorm_kernel, eps=eps),
            out_shape=jax.ShapeDtypeStruct((tokens, hidden), out_dtype),
            grid=grid,
            in_specs=[row_spec, w_spec],
            out_specs=row_spec,
            compiler_params=cparams,
        )(hidden_states, w2d)
        return normed, hidden_states

    normed, res = pl.pallas_call(
        functools.partial(_rmsnorm_residual_kernel, eps=eps),
        out_shape=(
            jax.ShapeDtypeStruct((tokens, hidden), out_dtype),   # normed
            jax.ShapeDtypeStruct((tokens, hidden), in_dtype),    # residual out
        ),
        grid=grid,
        in_specs=[row_spec, row_spec, w_spec],
        out_specs=(row_spec, row_spec),
        # residual-out overwrites the hidden_states buffer in place when the
        # caller donates it (XLA copies defensively otherwise).
        input_output_aliases={0: 1},
        compiler_params=cparams,
    )(hidden_states, residual, w2d)
    return normed, res


def _reference(hidden_states, weight, residual, eps):
    if residual is not None:
        hidden_states = hidden_states + residual
    res = hidden_states
    x = hidden_states.astype(jnp.float32)
    var = jnp.mean(x * x, axis=-1, keepdims=True)
    x = x * jax.lax.rsqrt(var + eps)
    if weight.dtype in (jnp.float16, jnp.bfloat16):
        x = x.astype(weight.dtype)
    return weight * x, res


if __name__ == "__main__":
    key = jax.random.PRNGKey(0)
    k1, k2, k3, k4 = jax.random.split(key, 4)

    seq, hidden = 8, 32
    dtype = jnp.bfloat16

    x = jax.random.normal(k1, (seq, hidden), dtype=jnp.float32).astype(dtype)
    residual = jax.random.normal(k2, (seq, hidden), dtype=jnp.float32).astype(dtype)
    # deterministic "checkpoint" weight (module __init__ loads a 1-D weight of size hidden)
    weight = (1.0 + 0.01 * jnp.arange(hidden, dtype=jnp.float32)).astype(dtype)

    eps = 1e-6

    # compute references before running the (potentially aliasing) kernels
    ref_n1, ref_r1 = _reference(x, weight, None, eps)
    ref_n2, ref_r2 = _reference(x, weight, residual, eps)

    # path 1: residual=None
    normed1, res1 = qwen2_rmsnorm(x, weight, residual=None, eps=eps)
    jax.block_until_ready((normed1, res1))
    assert jnp.allclose(normed1.astype(jnp.float32), ref_n1.astype(jnp.float32), atol=3e-2, rtol=3e-2)
    assert jnp.allclose(res1.astype(jnp.float32), ref_r1.astype(jnp.float32), atol=3e-2, rtol=3e-2)

    # path 2: with residual
    normed2, res2 = qwen2_rmsnorm(x, weight, residual=residual, eps=eps)
    jax.block_until_ready((normed2, res2))
    assert jnp.allclose(normed2.astype(jnp.float32), ref_n2.astype(jnp.float32), atol=3e-2, rtol=3e-2)
    assert jnp.allclose(res2.astype(jnp.float32), ref_r2.astype(jnp.float32), atol=3e-2, rtol=3e-2)

    # path 3: non-divisible token count exercises the cdiv grid + masked
    # partial last block (24 tokens with a forced 16-row block -> 8-row tail).
    seq3 = 24
    x3 = jax.random.normal(k3, (seq3, hidden), dtype=jnp.float32).astype(dtype)
    r3 = jax.random.normal(k4, (seq3, hidden), dtype=jnp.float32).astype(dtype)
    ref_n3, ref_r3 = _reference(x3, weight, r3, eps)
    normed3, res3 = qwen2_rmsnorm(x3, weight, residual=r3, eps=eps, block_rows=16)
    jax.block_until_ready((normed3, res3))
    assert jnp.allclose(normed3.astype(jnp.float32), ref_n3.astype(jnp.float32), atol=3e-2, rtol=3e-2)
    assert jnp.allclose(res3.astype(jnp.float32), ref_r3.astype(jnp.float32), atol=3e-2, rtol=3e-2)

    print("KERNEL_OK")
</pallas_src>

<mosaic_0001>
module attributes {stable_mosaic.version = 11 : i64} {
  func.func @_rmsnorm_kernel(%arg0: i32, %arg1: memref<8x32xbf16, #tpu.memory_space<vmem>>, %arg2: memref<1x32xf32, #tpu.memory_space<vmem>>, %arg3: memref<8x32xbf16, #tpu.memory_space<vmem>>) attributes {dimension_semantics = [#tpu.dimension_semantics<parallel>], iteration_bounds = array<i64: 1>, scalar_prefetch = 0 : i64, scratch_operands = 0 : i64, tpu.core_type = #tpu.core_type<tc>, window_params = [{transform_indices = @transform_0, window_bounds = array<i64: 8, 32>}, {pipeline_mode = #tpu.pipeline_mode<synchronous>, transform_indices = @transform_1, window_bounds = array<i64: 1, 32>}, {transform_indices = @transform_2, window_bounds = array<i64: 8, 32>}]} {
    %c0 = arith.constant 0 : index
    %c0_0 = arith.constant 0 : index
    %0 = vector.load %arg1[%c0, %c0_0] : memref<8x32xbf16, #tpu.memory_space<vmem>>, vector<8x32xbf16>
    %1 = arith.extf %0 : vector<8x32xbf16> to vector<8x32xf32>
    %2 = arith.mulf %1, %1 : vector<8x32xf32>
    %cst = arith.constant dense<0.000000e+00> : vector<8xf32>
    %3 = vector.multi_reduction <add>, %2, %cst [1] : vector<8x32xf32> to vector<8xf32>
    %4 = vector.shape_cast %3 : vector<8xf32> to vector<8x1xf32>
    %cst_1 = arith.constant 3.200000e+01 : f32
    %5 = vector.broadcast %cst_1 : f32 to vector<8x1xf32>
    %6 = arith.divf %4, %5 : vector<8x1xf32>
    %cst_2 = arith.constant 9.99999997E-7 : f32
    %7 = vector.broadcast %cst_2 : f32 to vector<8x1xf32>
    %8 = arith.addf %6, %7 : vector<8x1xf32>
    %9 = math.rsqrt %8 : vector<8x1xf32>
    %10 = vector.broadcast %9 : vector<8x1xf32> to vector<8x32xf32>
    %11 = arith.mulf %1, %10 : vector<8x32xf32>
    %c0_3 = arith.constant 0 : index
    %c0_4 = arith.constant 0 : index
    %12 = vector.load %arg2[%c0_3, %c0_4] : memref<1x32xf32, #tpu.memory_space<vmem>>, vector<1x32xf32>
    %13 = vector.broadcast %12 : vector<1x32xf32> to vector<8x32xf32>
    %14 = arith.mulf %11, %13 : vector<8x32xf32>
    %15 = arith.truncf %14 : vector<8x32xf32> to vector<8x32xbf16>
    %c0_5 = arith.constant 0 : index
    %c0_6 = arith.constant 0 : index
    %16 = vector.load %arg3[%c0_5, %c0_6] : memref<8x32xbf16, #tpu.memory_space<vmem>>, vector<8x32xbf16>
    tpu.vector_store %arg3[%c0_5, %c0_6], %15 {strides = array<i32>} : memref<8x32xbf16, #tpu.memory_space<vmem>>, vector<8x32xbf16>,
    return
  }
  func.func @transform_0(%arg0: i32) -> (i32, i32) {
    %c0_i32 = arith.constant 0 : i32
    %c0_i32_0 = arith.constant 0 : i32
    return %arg0, %c0_i32 : i32, i32
  }
  func.func @transform_1(%arg0: i32) -> (i32, i32) {
    %c0_i32 = arith.constant 0 : i32
    %c0_i32_0 = arith.constant 0 : i32
    %c0_i32_1 = arith.constant 0 : i32
    return %c0_i32, %c0_i32_0 : i32, i32
  }
  func.func @transform_2(%arg0: i32) -> (i32, i32) {
    %c0_i32 = arith.constant 0 : i32
    %c0_i32_0 = arith.constant 0 : i32
    return %arg0, %c0_i32 : i32, i32
  }
}

</mosaic_0001>

<llo_original>
// kernel: tpu_custom_call.1
$region0: #{tpu_custom_call.1}
  #allocation0 [shape = 'u32[]', space=smem, size = 0x4, offset = 0x4, fixed_abs, tag = 'smem constant byte address 0x4 - core index']
  #allocation1 [shape = 'u32[72,128]{1,0:T(1,128)}', space=vmem, size = 0x9000, scoped, tag = 'internal scratch']
  %s0 = inlined_call_operand.hbm [shape: bf16[8,32], index: 0, kind: input, shape index: {}]
  %s1 = inlined_call_operand.hbm [shape: f32[1,32], index: 1, kind: input, shape index: {}]
  %s2 = inlined_call_operand.hbm [shape: bf16[8,32], index: 2, kind: output, shape index: {}]
  %s3 = sld [smem:[#allocation0]]
  $region26: #{tpu_custom_call.1} parent=0
    _
  %s5 = ssub.s32 1, %s3
  %s6 = scalar_select 0, %s5, %s3
  $region1: #{tpu_custom_call.1} parent=0
    #allocation2 [shape = 'u8[2048]{0}', space=vmem, size = 0x800, scoped, tag = 'input window, operand 0, single buffered']
    #allocation3 [shape = 's32[1]{0}', space=sflag, size = 0x4, scoped, tag = 'scoped memory for tpu_custom_call.1']
    #allocation4 [shape = 's32[1]{0}', space=sflag, size = 0x4, scoped, tag = 'scoped memory for tpu_custom_call.1']
    #allocation5 [shape = 'u8[512]{0}', space=vmem, size = 0x400, scoped, tag = 'input window, operand 1, single buffered']
    #allocation6 [shape = 's32[1]{0}', space=sflag, size = 0x4, scoped, tag = 'scoped memory for tpu_custom_call.1']
    #allocation7 [shape = 'u8[2048]{0}', space=vmem, size = 0x800, scoped, tag = 'output window, operand 0, single buffered']
    %7 = vsyncpa [#allocation3], 0
    %8 = vsyncpa [#allocation6], 0
    %9 = vsyncpa [#allocation4], 0
    // Predicated region
    $region2: #{tpu_custom_call.1} parent=1 // pred_check
      _
    $region3: #{tpu_custom_call.1} parent=1 // pred_check_branch
      %11 = sbr.rel (0) target = $region5
    $region4: #{tpu_custom_call.1} parent=1 // pred_region
      %13 = vsyncadd [#allocation3], 0
      %s15 = sshll.u32 %s0, 4
      %s16 = int_to_ptr.hbm [resolvable:$true] %s15
      %s17 = sshll.u32 [#allocation2], 4
      %s18 = int_to_ptr.vmem [resolvable:$true] %s17
      %20 = dma.hbm_to_vmem [thread:$0]  %s16, 64, %s18, [#allocation3]
    $region5: #{tpu_custom_call.1} parent=1 // pred_fallthru
      _
    // Predicated region
    $region6: #{tpu_custom_call.1} parent=1 // pred_check
      _
    $region7: #{tpu_custom_call.1} parent=1 // pred_check_branch
      %22 = sbr.rel (0) target = $region9
    $region8: #{tpu_custom_call.1} parent=1 // pred_region
      %24 = vsyncadd [#allocation6], 0
      %s26 = sshll.u32 %s1, 4
      %s27 = int_to_ptr.hbm [resolvable:$true] %s26
      %s28 = sshll.u32 [#allocation5], 4
      %s29 = int_to_ptr.vmem [resolvable:$true] %s28
      %31 = dma.hbm_to_vmem [thread:$0]  %s27, 16, %s29, [#allocation6]
    $region9: #{tpu_custom_call.1} parent=1 // pred_fallthru
      _
    // Predicated region
    $region10: #{tpu_custom_call.1} parent=1 // pred_check
      _
    $region11: #{tpu_custom_call.1} parent=1 // pred_check_branch
      %33 = sbr.rel (0) target = $region13
    $region12: #{tpu_custom_call.1} parent=1 // pred_region
      %35 = dma.done [#allocation3], 64
    $region13: #{tpu_custom_call.1} parent=1 // pred_fallthru
      _
    // Predicated region
    $region14: #{tpu_custom_call.1} parent=1 // pred_check
      _
    $region15: #{tpu_custom_call.1} parent=1 // pred_check_branch
      %37 = sbr.rel (0) target = $region17
    $region16: #{tpu_custom_call.1} parent=1 // pred_region
      %39 = dma.done [#allocation6], 16
    $region17: #{tpu_custom_call.1} parent=1 // pred_fallthru
      _
    %v40 = vld [vmem:[#allocation2] sm:$0xf]
    %v41 = vunpack.c.l.bf16 %v40
    %v42 = vmul.f32 %v41, %v41
    %vm43 = vcmask 261120
    %v44 = vsel %vm43, %v42, 0.0
    %45 = vadd.xlane.f32.xlu0 %v44
    %v46 = vpop.xlane.xlu0 %45
    %v47 = vrcp.pop 32.0
    %v48 = vmul.f32 32.0, %v47
    %v49 = vsub.f32 1.0, %v48
    %v50 = vmul.f32 %v47, %v49
    %v51 = vadd.f32 %v47, %v50
    %vm52 = vweird.f32 %v47
    %v53 = vsel %vm52, %v47, %v51
    %v54 = vmul.f32 %v46, %v53
    %v55 = vadd.f32 %v54, 1e-06
    %v56 = vrsqrt.pop %v55
    %v57 = vmul.f32 %v56, %v55
    %v58 = vmul.f32 %v57, %v56
    %v59 = vmul.f32 0.5, %v58
    %v60 = vsub.f32 1.5, %v59
    %v61 = vmul.f32 %v56, %v60
    %vm62 = vweird.f32 %v55
    %vm63 = vweird.f32 %v56
    %vm64 = vmor %vm62, %vm63
    %v65 = vsel %vm64, %v56, %v61
    %v66 = vmul.f32 %v41, %v65
    %v67 = vld [vmem:[#allocation5] sm:$0x1]
    %v69 = vperm.slane %v67, 0
    %v71 = vmul.f32 %v66, %v69
    %v72 = vpack.c.bf16 %v71, %v71
    %vm73 = vcmask 257024
    %74 = vst.msk [vmem:[#allocation7] sm:$0xf] %vm73, %v72
    // Predicated region
    $region18: #{tpu_custom_call.1} parent=1 // pred_check
      _
    $region19: #{tpu_custom_call.1} parent=1 // pred_check_branch
      %76 = sbr.rel (0) target = $region21
    $region20: #{tpu_custom_call.1} parent=1 // pred_region
      %78 = vsyncadd [#allocation4], 0
      %s80 = sshll.u32 [#allocation7], 4
      %s81 = int_to_ptr.vmem [resolvable:$true] %s80
      %s82 = sshll.u32 %s2, 4
      %s83 = int_to_ptr.hbm [resolvable:$true] %s82
      %85 = dma.vmem_to_hbm [thread:$0]  %s81, 64, %s83, [#allocation4]
    $region21: #{tpu_custom_call.1} parent=1 // pred_fallthru
      _
    // Predicated region
    $region22: #{tpu_custom_call.1} parent=1 // pred_check
      _
    $region23: #{tpu_custom_call.1} parent=1 // pred_check_branch
      %87 = sbr.rel (0) target = $region25
    $region24: #{tpu_custom_call.1} parent=1 // pred_region
      %89 = dma.done [#allocation4], 64
    $region25: #{tpu_custom_call.1} parent=1 // pred_fallthru
      _
    %90 = vsyncpa [#allocation3], 1
    %91 = vsyncpa [#allocation6], 1
    %92 = vsyncpa [#allocation4], 1

</llo_original>
